<compile_context>
chip_gen: v7x
topology: tpu7x:2x2x1
jax: 0.10.0
libtpu: 0.0.40
codegen_flags: <defaults>
</compile_context>

<pallas_src>
import functools

import jax
import jax.numpy as jnp
from jax import lax
from jax.experimental import pallas as pl
from jax.experimental.pallas import tpu as pltpu


def _conv3x3_kernel(x_ref, w_ref, o_ref, x27_ref, *, W):
    """3x3 / stride-1 / pad-1 conv for one block of images (NCHW, spatial flattened).

    x_ref:   (B, Cin, P)      input block, input dtype (f32), lane axis = flat spatial
    w_ref:   (Cout, 9*Cin)    bf16 weights, K index = (kh*3 + kw)*Cin + cin
    o_ref:   (B, Cout, P)     output block (lane-dense, already NCHW order)
    x27_ref: (B, 9*Cin, P)    f32 VMEM staging buffer for the K=27 im2col operand
    """
    B, Cin, P = x_ref.shape
    Cout = o_ref.shape[1]
    K = 9 * Cin

    x = x_ref[...].astype(jnp.float32)                       # (B, Cin, P)

    # Column index within each image row, shape (1,1,P) (broadcast in the selects).
    col = lax.broadcasted_iota(jnp.int32, (1, 1, P), 2)
    col = (col & (W - 1)) if (W & (W - 1)) == 0 else (col % W)

    # Source-side edge masks (2 selects total instead of 6 on shifted data):
    #  dw=+1 taps: the value that would land on output col W-1 comes from source
    #  col 0 (of the next row), so zero col 0 of the source once.
    x_pos = jnp.where(col != 0, x, 0.0)
    #  dw=-1 taps: output col 0 would read source col W-1 (of the previous row).
    x_neg = jnp.where(col != W - 1, x, 0.0)

    def shift(src, s):
        """y[..., p] = src[..., p + s] (static s), zero-filled out of range."""
        if s == 0:
            return src
        pad = jnp.zeros(src.shape[:-1] + (abs(s),), src.dtype)
        if s > 0:
            return jnp.concatenate([src[..., s:], pad], axis=-1)
        return jnp.concatenate([pad, src[..., :P + s]], axis=-1)

    # Stage the 9 shifted taps as rows [k*Cin : (k+1)*Cin) of the K=27 operand.
    # The zero fill of the flat shift covers the top/bottom (dh) out-of-range rows;
    # the left/right (dw) wrap is covered by the pre-masked sources above.
    k = 0
    for dh in (-1, 0, 1):
        for dw in (-1, 0, 1):
            src = x_pos if dw == 1 else (x_neg if dw == -1 else x)
            x27_ref[:, k * Cin:(k + 1) * Cin, :] = shift(src, dh * W + dw)
            k += 1

    # One batched MXU matmul with K=27; accumulation stays inside the MXU and the
    # output is written exactly once (no accumulator RMW traffic).
    x27 = x27_ref[...].astype(jnp.bfloat16)                  # (B, K, P)
    w = jnp.broadcast_to(w_ref[...][None], (B, Cout, K))     # one tiny broadcast/step
    y = lax.dot_general(                                     # 'bmk,bkp->bmp'
        w, x27,
        dimension_numbers=(((2,), (1,)), ((0,), (0,))),
        preferred_element_type=jnp.float32)                  # (B, Cout, P) f32
    o_ref[...] = y.astype(o_ref.dtype)


def _pick_batch_block(n, cin, cout, p, in_itemsize, out_itemsize,
                      budget_bytes=16 * 1024 * 1024):
    """Images per grid step: as large as the VMEM budget allows, preferring >= 2
    grid steps (pipeline overlap; feeds both v7x TensorCores)."""
    per_img = p * (2 * cin * in_itemsize        # input block, double buffered
                   + 2 * cout * out_itemsize    # output block, double buffered
                   + 9 * cin * 4                # f32 K=27 staging scratch
                   + 3 * cin * 4                # x + two masked source copies
                   + cout * 4)                  # f32 matmul result before store
    max_b = max(1, budget_bytes // per_img)
    cands = [b for b in (256, 128, 64, 32, 16, 8, 4, 2, 1) if b <= max_b]
    for b in cands:
        if n % b == 0 and n // b >= 2:
            return b
    for b in cands:                     # small N: allow a single fat grid step
        if n % b == 0:
            return b
    # NOTE: prime/odd N degrades to B=1 (correct, slow); pad N upstream if it matters.
    return 1


@functools.partial(jax.jit, static_argnames=("out_dtype",))
def preproc_forward(x_nchw, w_oihw, out_dtype=None):
    """PreProc.forward (dataset='cifar'): y = conv3x3(x), stride 1, pad 1, no bias.

    x_nchw: (N, Cin, H, W) float32
    w_oihw: (Cout, Cin, 3, 3) float32 (PyTorch Conv2d layout)
    out_dtype: None -> x dtype (f32, module semantics); pass jnp.bfloat16 to halve
               the dominant output HBM traffic if downstream accepts it.
    returns (N, Cout, H, W) in out_dtype
    """
    N, Cin, H, W = x_nchw.shape
    Cout = w_oihw.shape[0]
    P = H * W
    out_dtype = x_nchw.dtype if out_dtype is None else jnp.dtype(out_dtype)

    B = _pick_batch_block(N, Cin, Cout, P,
                          jnp.dtype(x_nchw.dtype).itemsize,
                          jnp.dtype(out_dtype).itemsize)

    # (N,Cin,H,W)->(N,Cin,P) merges trailing dims only: no data movement, no cast
    # (bf16 cast happens inside the kernel so the input is read from HBM once).
    x_flat = x_nchw.reshape(N, Cin, P)
    # (Cout, Cin, 3, 3) -> (Cout, 3, 3, Cin) -> (Cout, 27), K = tap*Cin + cin (tiny).
    w27 = jnp.transpose(w_oihw, (0, 2, 3, 1)).reshape(Cout, 9 * Cin).astype(jnp.bfloat16)

    kernel = functools.partial(_conv3x3_kernel, W=W)
    out_flat = pl.pallas_call(
        kernel,
        out_shape=jax.ShapeDtypeStruct((N, Cout, P), out_dtype),
        grid_spec=pltpu.PrefetchScalarGridSpec(
            num_scalar_prefetch=0,
            grid=(N // B,),
            in_specs=[
                pl.BlockSpec((B, Cin, P), lambda n: (n, 0, 0)),
                pl.BlockSpec((Cout, 9 * Cin), lambda n: (0, 0)),   # resident weights
            ],
            out_specs=pl.BlockSpec((B, Cout, P), lambda n: (n, 0, 0)),
            scratch_shapes=[pltpu.VMEM((B, 9 * Cin, P), jnp.float32)],
        ),
        compiler_params=pltpu.CompilerParams(
            dimension_semantics=("parallel",),
            vmem_limit_bytes=40 * 1024 * 1024),
    )(x_flat, w27)

    # Trailing-dim split: free metadata reshape back to NCHW.
    return out_flat.reshape(N, Cout, H, W)


if __name__ == "__main__":
    key = jax.random.PRNGKey(0)
    kx, kw = jax.random.split(key)

    # Small shapes consistent with the cifar branch defaults: indepth=3, outdepth=16.
    # N=8 so the chosen block B=4 exercises the batched (B>1) in-kernel path.
    N, Cin, H, W = 8, 3, 16, 16
    Cout = 16

    x = jax.random.normal(kx, (N, Cin, H, W), dtype=jnp.float32)
    fan_in = Cin * 3 * 3
    bound = 1.0 / (fan_in ** 0.5)
    w = jax.random.uniform(kw, (Cout, Cin, 3, 3), dtype=jnp.float32,
                           minval=-bound, maxval=bound)

    y = preproc_forward(x, w)
    y = jax.block_until_ready(y)

    # Reference with the same bf16-rounded operands and f32 accumulation, so the
    # comparison isolates the kernel math (bf16 MXU products are exact in f32).
    x_bf = x.astype(jnp.bfloat16).astype(jnp.float32)
    w_bf = w.astype(jnp.bfloat16).astype(jnp.float32)
    y_ref = lax.conv_general_dilated(
        x_bf, w_bf, window_strides=(1, 1), padding=((1, 1), (1, 1)),
        dimension_numbers=("NCHW", "OIHW", "NCHW"),
        preferred_element_type=jnp.float32,
        precision=lax.Precision.HIGHEST)

    assert y.shape == (N, Cout, H, W)
    err = float(jnp.max(jnp.abs(y - y_ref)))
    assert jnp.allclose(y, y_ref, atol=2e-3, rtol=2e-3), err

    print("KERNEL_OK")
</pallas_src>

<mosaic_0001>
module attributes {stable_mosaic.version = 11 : i64} {
  func.func @_conv3x3_kernel(%arg0: i32, %arg1: memref<4x3x256xf32, #tpu.memory_space<vmem>>, %arg2: memref<16x27xbf16, #tpu.memory_space<vmem>>, %arg3: memref<4x16x256xf32, #tpu.memory_space<vmem>>, %arg4: memref<4x27x256xf32, #tpu.memory_space<vmem>>) attributes {dimension_semantics = [#tpu.dimension_semantics<parallel>], iteration_bounds = array<i64: 2>, scalar_prefetch = 0 : i64, scratch_operands = 1 : i64, tpu.core_type = #tpu.core_type<tc>, window_params = [{transform_indices = @transform_0, window_bounds = array<i64: 4, 3, 256>}, {pipeline_mode = #tpu.pipeline_mode<synchronous>, transform_indices = @transform_1, window_bounds = array<i64: 16, 27>}, {transform_indices = @transform_2, window_bounds = array<i64: 4, 16, 256>}]} {
    %c0 = arith.constant 0 : index
    %c0_0 = arith.constant 0 : index
    %c0_1 = arith.constant 0 : index
    %0 = vector.load %arg1[%c0, %c0_0, %c0_1] : memref<4x3x256xf32, #tpu.memory_space<vmem>>, vector<4x3x256xf32>
    %1 = tpu.iota {dimensions = array<i32: 2>} : vector<1x1x256xi32>
    %c15_i32 = arith.constant 15 : i32
    %2 = vector.broadcast %c15_i32 : i32 to vector<1x1x256xi32>
    %3 = arith.andi %1, %2 : vector<1x1x256xi32>
    %c0_i32 = arith.constant 0 : i32
    %4 = vector.broadcast %c0_i32 : i32 to vector<1x1x256xi32>
    %5 = arith.cmpi ne, %3, %4 : vector<1x1x256xi32>
    %cst = arith.constant 0.000000e+00 : f32
    %6 = vector.shape_cast %5 : vector<1x1x256xi1> to vector<1x1x256xi1>
    %7 = vector.broadcast %6 : vector<1x1x256xi1> to vector<4x3x256xi1>
    %8 = vector.broadcast %cst : f32 to vector<4x3x256xf32>
    %9 = arith.select %7, %0, %8 : vector<4x3x256xi1>, vector<4x3x256xf32>
    %c15_i32_2 = arith.constant 15 : i32
    %10 = vector.broadcast %c15_i32_2 : i32 to vector<1x1x256xi32>
    %11 = arith.cmpi ne, %3, %10 : vector<1x1x256xi32>
    %cst_3 = arith.constant 0.000000e+00 : f32
    %12 = vector.shape_cast %11 : vector<1x1x256xi1> to vector<1x1x256xi1>
    %13 = vector.broadcast %12 : vector<1x1x256xi1> to vector<4x3x256xi1>
    %14 = vector.broadcast %cst_3 : f32 to vector<4x3x256xf32>
    %15 = arith.select %13, %0, %14 : vector<4x3x256xi1>, vector<4x3x256xf32>
    %cst_4 = arith.constant 0.000000e+00 : f32
    %16 = vector.broadcast %cst_4 : f32 to vector<4x3x17xf32>
    %17 = vector.extract_strided_slice %15 {offsets = [0, 0, 0], sizes = [4, 3, 239], strides = [1, 1, 1]} : vector<4x3x256xf32> to vector<4x3x239xf32>
    %18 = tpu.concatenate %16, %17 in 2 : vector<4x3x17xf32>, vector<4x3x239xf32> -> vector<4x3x256xf32>
    %c0_5 = arith.constant 0 : index
    %c0_6 = arith.constant 0 : index
    %c0_7 = arith.constant 0 : index
    %19 = vector.load %arg4[%c0_5, %c0_6, %c0_7] : memref<4x27x256xf32, #tpu.memory_space<vmem>>, vector<4x3x256xf32>
    tpu.vector_store %arg4[%c0_5, %c0_6, %c0_7], %18 {strides = array<i32>} : memref<4x27x256xf32, #tpu.memory_space<vmem>>, vector<4x3x256xf32>,
    %cst_8 = arith.constant 0.000000e+00 : f32
    %20 = vector.broadcast %cst_8 : f32 to vector<4x3x16xf32>
    %21 = vector.extract_strided_slice %0 {offsets = [0, 0, 0], sizes = [4, 3, 240], strides = [1, 1, 1]} : vector<4x3x256xf32> to vector<4x3x240xf32>
    %22 = tpu.concatenate %20, %21 in 2 : vector<4x3x16xf32>, vector<4x3x240xf32> -> vector<4x3x256xf32>
    %c0_9 = arith.constant 0 : index
    %c3 = arith.constant 3 : index
    %c0_10 = arith.constant 0 : index
    %23 = vector.load %arg4[%c0_9, %c3, %c0_10] : memref<4x27x256xf32, #tpu.memory_space<vmem>>, vector<4x3x256xf32>
    tpu.vector_store %arg4[%c0_9, %c3, %c0_10], %22 {strides = array<i32>} : memref<4x27x256xf32, #tpu.memory_space<vmem>>, vector<4x3x256xf32>,
    %cst_11 = arith.constant 0.000000e+00 : f32
    %24 = vector.broadcast %cst_11 : f32 to vector<4x3x15xf32>
    %25 = vector.extract_strided_slice %9 {offsets = [0, 0, 0], sizes = [4, 3, 241], strides = [1, 1, 1]} : vector<4x3x256xf32> to vector<4x3x241xf32>
    %26 = tpu.concatenate %24, %25 in 2 : vector<4x3x15xf32>, vector<4x3x241xf32> -> vector<4x3x256xf32>
    %c0_12 = arith.constant 0 : index
    %c6 = arith.constant 6 : index
    %c0_13 = arith.constant 0 : index
    %27 = vector.load %arg4[%c0_12, %c6, %c0_13] : memref<4x27x256xf32, #tpu.memory_space<vmem>>, vector<4x3x256xf32>
    tpu.vector_store %arg4[%c0_12, %c6, %c0_13], %26 {strides = array<i32>} : memref<4x27x256xf32, #tpu.memory_space<vmem>>, vector<4x3x256xf32>,
    %cst_14 = arith.constant 0.000000e+00 : f32
    %28 = vector.broadcast %cst_14 : f32 to vector<4x3x1xf32>
    %29 = vector.extract_strided_slice %15 {offsets = [0, 0, 0], sizes = [4, 3, 255], strides = [1, 1, 1]} : vector<4x3x256xf32> to vector<4x3x255xf32>
    %30 = tpu.concatenate %28, %29 in 2 : vector<4x3x1xf32>, vector<4x3x255xf32> -> vector<4x3x256xf32>
    %c0_15 = arith.constant 0 : index
    %c9 = arith.constant 9 : index
    %c0_16 = arith.constant 0 : index
    %31 = vector.load %arg4[%c0_15, %c9, %c0_16] : memref<4x27x256xf32, #tpu.memory_space<vmem>>, vector<4x3x256xf32>
    tpu.vector_store %arg4[%c0_15, %c9, %c0_16], %30 {strides = array<i32>} : memref<4x27x256xf32, #tpu.memory_space<vmem>>, vector<4x3x256xf32>,
    %c0_17 = arith.constant 0 : index
    %c12 = arith.constant 12 : index
    %c0_18 = arith.constant 0 : index
    %32 = vector.load %arg4[%c0_17, %c12, %c0_18] : memref<4x27x256xf32, #tpu.memory_space<vmem>>, vector<4x3x256xf32>
    tpu.vector_store %arg4[%c0_17, %c12, %c0_18], %0 {strides = array<i32>} : memref<4x27x256xf32, #tpu.memory_space<vmem>>, vector<4x3x256xf32>,
    %cst_19 = arith.constant 0.000000e+00 : f32
    %33 = vector.broadcast %cst_19 : f32 to vector<4x3x1xf32>
    %34 = vector.extract_strided_slice %9 {offsets = [0, 0, 1], sizes = [4, 3, 255], strides = [1, 1, 1]} : vector<4x3x256xf32> to vector<4x3x255xf32>
    %35 = tpu.concatenate %34, %33 in 2 : vector<4x3x255xf32>, vector<4x3x1xf32> -> vector<4x3x256xf32>
    %c0_20 = arith.constant 0 : index
    %c15 = arith.constant 15 : index
    %c0_21 = arith.constant 0 : index
    %36 = vector.load %arg4[%c0_20, %c15, %c0_21] : memref<4x27x256xf32, #tpu.memory_space<vmem>>, vector<4x3x256xf32>
    tpu.vector_store %arg4[%c0_20, %c15, %c0_21], %35 {strides = array<i32>} : memref<4x27x256xf32, #tpu.memory_space<vmem>>, vector<4x3x256xf32>,
    %cst_22 = arith.constant 0.000000e+00 : f32
    %37 = vector.broadcast %cst_22 : f32 to vector<4x3x15xf32>
    %38 = vector.extract_strided_slice %15 {offsets = [0, 0, 15], sizes = [4, 3, 241], strides = [1, 1, 1]} : vector<4x3x256xf32> to vector<4x3x241xf32>
    %39 = tpu.concatenate %38, %37 in 2 : vector<4x3x241xf32>, vector<4x3x15xf32> -> vector<4x3x256xf32>
    %c0_23 = arith.constant 0 : index
    %c18 = arith.constant 18 : index
    %c0_24 = arith.constant 0 : index
    %40 = vector.load %arg4[%c0_23, %c18, %c0_24] : memref<4x27x256xf32, #tpu.memory_space<vmem>>, vector<4x3x256xf32>
    tpu.vector_store %arg4[%c0_23, %c18, %c0_24], %39 {strides = array<i32>} : memref<4x27x256xf32, #tpu.memory_space<vmem>>, vector<4x3x256xf32>,
    %cst_25 = arith.constant 0.000000e+00 : f32
    %41 = vector.broadcast %cst_25 : f32 to vector<4x3x16xf32>
    %42 = vector.extract_strided_slice %0 {offsets = [0, 0, 16], sizes = [4, 3, 240], strides = [1, 1, 1]} : vector<4x3x256xf32> to vector<4x3x240xf32>
    %43 = tpu.concatenate %42, %41 in 2 : vector<4x3x240xf32>, vector<4x3x16xf32> -> vector<4x3x256xf32>
    %c0_26 = arith.constant 0 : index
    %c21 = arith.constant 21 : index
    %c0_27 = arith.constant 0 : index
    %44 = vector.load %arg4[%c0_26, %c21, %c0_27] : memref<4x27x256xf32, #tpu.memory_space<vmem>>, vector<4x3x256xf32>
    tpu.vector_store %arg4[%c0_26, %c21, %c0_27], %43 {strides = array<i32>} : memref<4x27x256xf32, #tpu.memory_space<vmem>>, vector<4x3x256xf32>,
    %cst_28 = arith.constant 0.000000e+00 : f32
    %45 = vector.broadcast %cst_28 : f32 to vector<4x3x17xf32>
    %46 = vector.extract_strided_slice %9 {offsets = [0, 0, 17], sizes = [4, 3, 239], strides = [1, 1, 1]} : vector<4x3x256xf32> to vector<4x3x239xf32>
    %47 = tpu.concatenate %46, %45 in 2 : vector<4x3x239xf32>, vector<4x3x17xf32> -> vector<4x3x256xf32>
    %c0_29 = arith.constant 0 : index
    %c24 = arith.constant 24 : index
    %c0_30 = arith.constant 0 : index
    %48 = vector.load %arg4[%c0_29, %c24, %c0_30] : memref<4x27x256xf32, #tpu.memory_space<vmem>>, vector<4x3x256xf32>
    tpu.vector_store %arg4[%c0_29, %c24, %c0_30], %47 {strides = array<i32>} : memref<4x27x256xf32, #tpu.memory_space<vmem>>, vector<4x3x256xf32>,
    %c0_31 = arith.constant 0 : index
    %c0_32 = arith.constant 0 : index
    %c0_33 = arith.constant 0 : index
    %49 = vector.load %arg4[%c0_31, %c0_32, %c0_33] : memref<4x27x256xf32, #tpu.memory_space<vmem>>, vector<4x27x256xf32>
    %50 = arith.truncf %49 : vector<4x27x256xf32> to vector<4x27x256xbf16>
    %c0_34 = arith.constant 0 : index
    %c0_35 = arith.constant 0 : index
    %51 = vector.load %arg2[%c0_34, %c0_35] : memref<16x27xbf16, #tpu.memory_space<vmem>>, vector<16x27xbf16>
    %52 = vector.shape_cast %51 : vector<16x27xbf16> to vector<1x16x27xbf16>
    %53 = vector.shape_cast %52 : vector<1x16x27xbf16> to vector<1x16x27xbf16>
    %54 = vector.broadcast %53 : vector<1x16x27xbf16> to vector<4x16x27xbf16>
    %cst_36 = arith.constant dense<0.000000e+00> : vector<4x16x256xf32>
    %55 = tpu.matmul %54, %50, %cst_36 {dimension_numbers = #tpu.dot_dimension_numbers<[2], [1], [1], [2], [0, 0, 0, 1, 1, 2], [0], [0]>} : vector<4x16x27xbf16>, vector<4x27x256xbf16>, vector<4x16x256xf32> -> vector<4x16x256xf32>
    %c0_37 = arith.constant 0 : index
    %c0_38 = arith.constant 0 : index
    %c0_39 = arith.constant 0 : index
    %56 = vector.load %arg3[%c0_37, %c0_38, %c0_39] : memref<4x16x256xf32, #tpu.memory_space<vmem>>, vector<4x16x256xf32>
    tpu.vector_store %arg3[%c0_37, %c0_38, %c0_39], %55 {strides = array<i32>} : memref<4x16x256xf32, #tpu.memory_space<vmem>>, vector<4x16x256xf32>,
    return
  }
  func.func @transform_0(%arg0: i32) -> (i32, i32, i32) {
    %c0_i32 = arith.constant 0 : i32
    %c0_i32_0 = arith.constant 0 : i32
    %c0_i32_1 = arith.constant 0 : i32
    return %arg0, %c0_i32, %c0_i32_0 : i32, i32, i32
  }
  func.func @transform_1(%arg0: i32) -> (i32, i32) {
    %c0_i32 = arith.constant 0 : i32
    %c0_i32_0 = arith.constant 0 : i32
    %c0_i32_1 = arith.constant 0 : i32
    return %c0_i32, %c0_i32_0 : i32, i32
  }
  func.func @transform_2(%arg0: i32) -> (i32, i32, i32) {
    %c0_i32 = arith.constant 0 : i32
    %c0_i32_0 = arith.constant 0 : i32
    %c0_i32_1 = arith.constant 0 : i32
    return %arg0, %c0_i32, %c0_i32_0 : i32, i32, i32
  }
}

</mosaic_0001>

<llo_original>
// kernel: preproc_forward.1
$region0: #{preproc_forward.1}
  #allocation0 [shape = 'u32[]', space=smem, size = 0x4, offset = 0x4, fixed_abs, tag = 'smem constant byte address 0x4 - core index']
  #allocation1 [shape = 'u32[144,128]{1,0:T(1,128)}', space=vmem, size = 0x12000, scoped, tag = 'internal scratch']
  #allocation2 [shape = 'f32[4,27,256]{2,1,0:T(8,128)}', space=vmem, size = 0x20000, scoped, tag = 'scratch operand']
  %s0 = inlined_call_operand.vmem [shape: f32[8,3,256], index: 0, kind: input, shape index: {}]
  %s1 = inlined_call_operand.vmem [shape: bf16[16,27], index: 1, kind: input, shape index: {}]
  %s2 = inlined_call_operand.vmem [shape: f32[8,16,256], index: 2, kind: output, shape index: {}]
  %s3 = sld [smem:[#allocation0]]
  $region41: #{preproc_forward.1} parent=0
    _
  %s5 = ssub.s32 1, %s3
  %s6 = scalar_select 0, %s5, %s3
  loop: start=0, step=1, limit=4
  $region2: #{preproc_forward.1} parent=0 // loop_pre_header
    _
  $region3: #{preproc_forward.1} parent=0 // loop_header
    %s8 = sphi 0, %s12
    %p9 = scmp.ge.s32.totalorder %s8, 4
    %s18 = sphi 0, %s20
    %s21 = sphi 0, %s18
    %s22 = sphi 0, %s21
    %s38 = sphi 0, %s22
    %s42 = sphi 0, %s42
    %s44 = sphi 0, %s42
    %s45 = sphi 0, %s44
    %s59 = sphi 0, %s45
    %s65 = sphi 0, %s67
    %s68 = sphi 0, %s65
    %s69 = sphi 0, %s68
    %s85 = sphi 0, %s69
  $region4: #{preproc_forward.1} parent=0 // loop_header_branch
    %11 = sbr.rel (%p9) target = $region8
  $region5: #{preproc_forward.1} parent=0 // loop_body
    %s13 = ssub.s32 %s8, 1
    %s14 = ssub.s32 %s8, 2
    %s15 = sadd.s32 %s8, 1
    %s16 = ssub.s32 %s8, %s15
    %p17 = scmp.eq.s32.totalorder %s16, 0
    %s19 = sadd.s32 %s18, 1
    %s20 = scalar_select %p17, %s18, %s19
    %p23 = pneg %p17
    %p24 = scmp.eq.s32.totalorder %s8, 1
    %p25 = por %p23, %p24
    %p26 = scmp.ne.s32.totalorder %s18, %s21
    %p27 = scmp.eq.s32.totalorder %s8, 0
    %p28 = por %p26, %p27
    %p29 = scmp.ne.s32.totalorder %s18, %s21
    %p30 = scmp.eq.s32.totalorder %s13, 1
    %p31 = por %p29, %p30
    %p32 = scmp.ne.s32.totalorder %s21, %s22
    %p33 = scmp.eq.s32.totalorder %s13, 0
    %p34 = por %p32, %p33
    %p35 = scmp.ne.s32.totalorder %s21, %s22
    %p36 = scmp.eq.s32.totalorder %s14, 1
    %p37 = por %p35, %p36
    %p39 = scmp.ne.s32.totalorder %s22, %s38
    %p40 = scmp.eq.s32.totalorder %s14, 0
    %p41 = por %p39, %p40
    %s43 = sadd.s32 %s42, 1
    %p46 = scmp.eq.s32.totalorder %s8, 1
    %p47 = scmp.ne.s32.totalorder %s42, %s44
    %p48 = scmp.eq.s32.totalorder %s8, 0
    %p49 = por %p47, %p48
    %p50 = scmp.ne.s32.totalorder %s42, %s44
    %p51 = scmp.eq.s32.totalorder %s13, 1
    %p52 = por %p50, %p51
    %p53 = scmp.ne.s32.totalorder %s44, %s45
    %p54 = scmp.eq.s32.totalorder %s13, 0
    %p55 = por %p53, %p54
    %p56 = scmp.ne.s32.totalorder %s44, %s45
    %p57 = scmp.eq.s32.totalorder %s14, 1
    %p58 = por %p56, %p57
    %p60 = scmp.ne.s32.totalorder %s45, %s59
    %p61 = scmp.eq.s32.totalorder %s14, 0
    %p62 = por %p60, %p61
    %s63 = ssub.s32 %s8, %s15
    %p64 = scmp.eq.s32.totalorder %s63, 0
    %s66 = sadd.s32 %s65, 1
    %s67 = scalar_select %p64, %s65, %s66
    %p70 = pneg %p64
    %p71 = scmp.eq.s32.totalorder %s8, 1
    %p72 = por %p70, %p71
    %p73 = scmp.ne.s32.totalorder %s65, %s68
    %p74 = scmp.eq.s32.totalorder %s8, 0
    %p75 = por %p73, %p74
    %p76 = scmp.ne.s32.totalorder %s65, %s68
    %p77 = scmp.eq.s32.totalorder %s13, 1
    %p78 = por %p76, %p77
    %p79 = scmp.ne.s32.totalorder %s68, %s69
    %p80 = scmp.eq.s32.totalorder %s13, 0
    %p81 = por %p79, %p80
    %p82 = scmp.ne.s32.totalorder %s68, %s69
    %p83 = scmp.eq.s32.totalorder %s14, 1
    %p84 = por %p82, %p83
    %p86 = scmp.ne.s32.totalorder %s69, %s85
    %p87 = scmp.eq.s32.totalorder %s14, 0
    %p88 = por %p86, %p87
    %p89 = scmp.le.s32.totalorder 1, %s8
    %p90 = scmp.lt.s32.totalorder %s8, 3
    %p91 = pnand %p89, %p90
    %p92 = pneg %p91
    // Predicated region
    $region9: #{preproc_forward.1} parent=5 // pred_check
      _
    $region10: #{preproc_forward.1} parent=5 // pred_check_branch
      %94 = sbr.rel (%p91) target = $region12
    $region11: #{preproc_forward.1} parent=5 // pred_region
      %s95 = ssub.s32 %s8, 1
      // Predicated region
      $region13: #{preproc_forward.1} parent=11 // pred_check
        %p96 = pneg %p55
      $region14: #{preproc_forward.1} parent=11 // pred_check_branch
        %98 = sbr.rel (%p96) target = $region16
      $region15: #{preproc_forward.1} parent=11 // pred_region
        _
      $region16: #{preproc_forward.1} parent=11 // pred_fallthru
        _
    $region12: #{preproc_forward.1} parent=5 // pred_fallthru
      _
    %p99 = scmp.lt.s32.totalorder %s8, 2
    // Predicated region
    $region17: #{preproc_forward.1} parent=5 // pred_check
      %p100 = pneg %p99
    $region18: #{preproc_forward.1} parent=5 // pred_check_branch
      %102 = sbr.rel (%p100) target = $region20
    $region19: #{preproc_forward.1} parent=5 // pred_region
      // Predicated region
      $region21: #{preproc_forward.1} parent=19 // pred_check
        %p103 = pneg %p28
      $region22: #{preproc_forward.1} parent=19 // pred_check_branch
        %105 = sbr.rel (%p103) target = $region24
      $region23: #{preproc_forward.1} parent=19 // pred_region
        %s106 = smul.u32 4, %s8
        %p107 = scmp.lt.s32.totalorder %s106, 7
        %s108 = scalar_select %p107, %s106, 7
        %s109 = smul.addr %s108, 2
        %s110 = smul.addr %s109, 4
        %s111 = scalar_lea.vmem %s0, %s110
        %s112 = smul.u32 4, %s8
      $region24: #{preproc_forward.1} parent=19 // pred_fallthru
        _
    $region20: #{preproc_forward.1} parent=5 // pred_fallthru
      _
    %p113 = scmp.le.s32.totalorder 1, %s8
    %p114 = scmp.lt.s32.totalorder %s8, 3
    %p115 = pnand %p113, %p114
    %p116 = pneg %p115
    // Predicated region
    $region25: #{preproc_forward.1} parent=5 // pred_check
      _
    $region26: #{preproc_forward.1} parent=5 // pred_check_branch
      %118 = sbr.rel (%p115) target = $region28
    $region27: #{preproc_forward.1} parent=5 // pred_region
      %s119 = ssub.s32 %s8, 1
      %s120 = smul.u32 4, %s13
      %p121 = scmp.lt.s32.totalorder %s120, 7
      %s122 = scalar_select %p121, %s120, 7
      %s123 = smul.addr %s122, 2
      %s124 = smul.addr %s123, 4
      %s125 = scalar_lea.vmem %s0, %s124
      %p126 = pneg %p34
      %p127 = pneg %p31
      %p128 = pneg %p55
      %p129 = pneg %p52
      %p130 = pneg %p81
      %p131 = pneg %p78
      %s132 = smul.u32 4, %s13
      %p133 = scmp.lt.s32.totalorder %s132, 7
      %s134 = scalar_select %p133, %s132, 7
      %s135 = smul.addr %s134, 4
      %s136 = smul.addr %s135, 8
      %s137 = scalar_lea.vmem %s2, %s136
      %s138 = smul.u32 4, %s13
      %p139 = scmp.lt.s32.totalorder %s138, 7
      %s140 = scalar_select %p139, %s138, 7
      %s141 = smul.addr %s140, 2
      %s142 = smul.addr %s141, 4
      %s143 = scalar_lea.vmem %s0, %s142
      %s144 = smul.u32 4, %s13
      %s145 = smul.u32 4, %s13
      %p146 = scmp.lt.s32.totalorder %s145, 7
      %s147 = scalar_select %p146, %s145, 7
      %s148 = smul.addr %s147, 4
      %s149 = smul.addr %s148, 8
      %s150 = scalar_lea.vmem %s2, %s149
      %s151 = smul.u32 4, %s13
      %v153 = vld [vmem:[%s143] sm:$0x77]
      %v154 = vld [vmem:[%s143 + $0x8] sm:$0x77]
      %v155 = vld [vmem:[%s143 + $0x10] sm:$0x77]
      %v156 = vld [vmem:[%s143 + $0x18] sm:$0x77]
      %v157 = vlaneseq
      %v158 = vand.u32 %v157, 127
      %v159 = vadd.s32 %v158, 128
      %v160 = vand.u32 %v158, 15
      %v161 = vand.u32 %v159, 15
      %vm162 = vcmp.ne.s32.totalorder %v160, 0
      %vm163 = vcmp.ne.s32.totalorder %v161, 0
      %v164 = vsel %vm162, 1, 0
      %v165 = vsel %vm163, 1, 0
      %vm166 = vcmp.eq.s32.totalorder %v164, 1
      %vm167 = vcmp.eq.s32.totalorder %v165, 1
      %v172 = vcombine.high %v153, %v153
      %v173 = vcombine.high %v154, %v154
      %v174 = vcombine.high %v155, %v155
      %v175 = vcombine.high %v156, %v156
      %v180 = vsel %vm166, %v153, 0.0
      %v181 = vsel %vm167, %v172, 0.0
      %v182 = vsel %vm166, %v154, 0.0
      %v183 = vsel %vm167, %v173, 0.0
      %v184 = vsel %vm166, %v155, 0.0
      %v185 = vsel %vm167, %v174, 0.0
      %v186 = vsel %vm166, %v156, 0.0
      %v187 = vsel %vm167, %v175, 0.0
      %vm188 = vcmp.ne.s32.totalorder %v160, 15
      %vm189 = vcmp.ne.s32.totalorder %v161, 15
      %v190 = vsel %vm188, 1, 0
      %v191 = vsel %vm189, 1, 0
      %vm192 = vcmp.eq.s32.totalorder %v190, 1
      %vm193 = vcmp.eq.s32.totalorder %v191, 1
      %v194 = vsel %vm192, %v153, 0.0
      %v195 = vsel %vm193, %v172, 0.0
      %v196 = vsel %vm192, %v154, 0.0
      %v197 = vsel %vm193, %v173, 0.0
      %v198 = vsel %vm192, %v155, 0.0
      %v199 = vsel %vm193, %v174, 0.0
      %v200 = vsel %vm192, %v156, 0.0
      %v201 = vsel %vm193, %v175, 0.0
      %210 = vrot.lane.b32.xlu0 %v194, 17
      %v211 = vpop.permute.xlu0 %210
      %212 = vrot.lane.b32.xlu0 %v195, 17
      %v213 = vpop.permute.xlu0 %212
      %214 = vrot.lane.b32.xlu0 %v196, 17
      %v215 = vpop.permute.xlu0 %214
      %216 = vrot.lane.b32.xlu0 %v197, 17
      %v217 = vpop.permute.xlu0 %216
      %218 = vrot.lane.b32.xlu0 %v198, 17
      %v219 = vpop.permute.xlu0 %218
      %220 = vrot.lane.b32.xlu0 %v199, 17
      %v221 = vpop.permute.xlu0 %220
      %222 = vrot.lane.b32.xlu0 %v200, 17
      %v223 = vpop.permute.xlu0 %222
      %224 = vrot.lane.b32.xlu0 %v201, 17
      %v225 = vpop.permute.xlu0 %224
      %vm226 = vcmask 138240
      %v227 = vsel %vm226, %v211, %v213
      %v228 = vsel %vm226, %v215, %v217
      %v229 = vsel %vm226, %v219, %v221
      %v230 = vsel %vm226, %v223, %v225
      %v239 = vsel %vm226, 0.0, %v211
      %v240 = vsel %vm226, 0.0, %v215
      %v241 = vsel %vm226, 0.0, %v219
      %v242 = vsel %vm226, 0.0, %v223
      %243 = vst [vmem:[#allocation2] sm:$0x7] %v239
      %244 = vst [vmem:[#allocation2 + $0x8] sm:$0x7] %v227
      %245 = vst [vmem:[#allocation2 + $0x40] sm:$0x7] %v240
      %246 = vst [vmem:[#allocation2 + $0x48] sm:$0x7] %v228
      %247 = vst [vmem:[#allocation2 + $0x80] sm:$0x7] %v241
      %248 = vst [vmem:[#allocation2 + $0x88] sm:$0x7] %v229
      %249 = vst [vmem:[#allocation2 + $0xc0] sm:$0x7] %v242
      %250 = vst [vmem:[#allocation2 + $0xc8] sm:$0x7] %v230
      %251 = vrot.lane.b32.xlu0 %v153, 16
      %v252 = vpop.permute.xlu0 %251
      %253 = vrot.lane.b32.xlu0 %v172, 16
      %v254 = vpop.permute.xlu0 %253
      %255 = vrot.lane.b32.xlu0 %v154, 16
      %v256 = vpop.permute.xlu0 %255
      %257 = vrot.lane.b32.xlu0 %v173, 16
      %v258 = vpop.permute.xlu0 %257
      %259 = vrot.lane.b32.xlu0 %v155, 16
      %v260 = vpop.permute.xlu0 %259
      %261 = vrot.lane.b32.xlu0 %v174, 16
      %v262 = vpop.permute.xlu0 %261
      %263 = vrot.lane.b32.xlu0 %v156, 16
      %v264 = vpop.permute.xlu0 %263
      %265 = vrot.lane.b32.xlu0 %v175, 16
      %v266 = vpop.permute.xlu0 %265
      %vm267 = vcmask 130048
      %v268 = vsel %vm267, %v252, %v254
      %v269 = vsel %vm267, %v256, %v258
      %v270 = vsel %vm267, %v260, %v262
      %v271 = vsel %vm267, %v264, %v266
      %v276 = vsel %vm267, 0.0, %v252
      %v277 = vsel %vm267, 0.0, %v256
      %v278 = vsel %vm267, 0.0, %v260
      %v279 = vsel %vm267, 0.0, %v264
      %v284 = vrot.slane %v276, 5
      %v285 = vrot.slane %v268, 5
      %v286 = vrot.slane %v277, 5
      %v287 = vrot.slane %v269, 5
      %v288 = vrot.slane %v278, 5
      %v289 = vrot.slane %v270, 5
      %v290 = vrot.slane %v279, 5
      %v291 = vrot.slane %v271, 5
      %300 = vst [vmem:[#allocation2] sm:$0x38] %v284
      %301 = vst [vmem:[#allocation2 + $0x8] sm:$0x38] %v285
      %302 = vst [vmem:[#allocation2 + $0x40] sm:$0x38] %v286
      %303 = vst [vmem:[#allocation2 + $0x48] sm:$0x38] %v287
      %304 = vst [vmem:[#allocation2 + $0x80] sm:$0x38] %v288
      %305 = vst [vmem:[#allocation2 + $0x88] sm:$0x38] %v289
      %306 = vst [vmem:[#allocation2 + $0xc0] sm:$0x38] %v290
      %307 = vst [vmem:[#allocation2 + $0xc8] sm:$0x38] %v291
      %316 = vrot.lane.b32.xlu0 %v180, 15
      %v317 = vpop.permute.xlu0 %316
      %318 = vrot.lane.b32.xlu0 %v181, 15
      %v319 = vpop.permute.xlu0 %318
      %320 = vrot.lane.b32.xlu0 %v182, 15
      %v321 = vpop.permute.xlu0 %320
      %322 = vrot.lane.b32.xlu0 %v183, 15
      %v323 = vpop.permute.xlu0 %322
      %324 = vrot.lane.b32.xlu0 %v184, 15
      %v325 = vpop.permute.xlu0 %324
      %326 = vrot.lane.b32.xlu0 %v185, 15
      %v327 = vpop.permute.xlu0 %326
      %328 = vrot.lane.b32.xlu0 %v186, 15
      %v329 = vpop.permute.xlu0 %328
      %330 = vrot.lane.b32.xlu0 %v187, 15
      %v331 = vpop.permute.xlu0 %330
      %vm332 = vcmask 121856
      %v333 = vsel %vm332, %v317, %v319
      %v334 = vsel %vm332, %v321, %v323
      %v335 = vsel %vm332, %v325, %v327
      %v336 = vsel %vm332, %v329, %v331
      %v341 = vsel %vm332, 0.0, %v317
      %v342 = vsel %vm332, 0.0, %v321
      %v343 = vsel %vm332, 0.0, %v325
      %v344 = vsel %vm332, 0.0, %v329
      %v349 = vrot.slane %v341, 2
      %v350 = vrot.slane %v333, 2
      %v351 = vrot.slane %v342, 2
      %v352 = vrot.slane %v334, 2
      %v353 = vrot.slane %v343, 2
      %v354 = vrot.slane %v335, 2
      %v355 = vrot.slane %v344, 2
      %v356 = vrot.slane %v336, 2
      %365 = vst [vmem:[#allocation2] sm:$0xc0] %v349
      %366 = vst [vmem:[#allocation2 + $0x8] sm:$0xc0] %v350
      %367 = vst [vmem:[#allocation2 + $0x10] sm:$0x1] %v349
      %368 = vst [vmem:[#allocation2 + $0x18] sm:$0x1] %v350
      %369 = vst [vmem:[#allocation2 + $0x40] sm:$0xc0] %v351
      %370 = vst [vmem:[#allocation2 + $0x48] sm:$0xc0] %v352
      %371 = vst [vmem:[#allocation2 + $0x50] sm:$0x1] %v351
      %372 = vst [vmem:[#allocation2 + $0x58] sm:$0x1] %v352
      %373 = vst [vmem:[#allocation2 + $0x80] sm:$0xc0] %v353
      %374 = vst [vmem:[#allocation2 + $0x88] sm:$0xc0] %v354
      %375 = vst [vmem:[#allocation2 + $0x90] sm:$0x1] %v353
      %376 = vst [vmem:[#allocation2 + $0x98] sm:$0x1] %v354
      %377 = vst [vmem:[#allocation2 + $0xc0] sm:$0xc0] %v355
      %378 = vst [vmem:[#allocation2 + $0xc8] sm:$0xc0] %v356
      %379 = vst [vmem:[#allocation2 + $0xd0] sm:$0x1] %v355
      %380 = vst [vmem:[#allocation2 + $0xd8] sm:$0x1] %v356
      %381 = vrot.lane.b32.xlu0 %v194, 1
      %v382 = vpop.permute.xlu0 %381
      %383 = vrot.lane.b32.xlu0 %v195, 1
      %v384 = vpop.permute.xlu0 %383
      %385 = vrot.lane.b32.xlu0 %v196, 1
      %v386 = vpop.permute.xlu0 %385
      %387 = vrot.lane.b32.xlu0 %v197, 1
      %v388 = vpop.permute.xlu0 %387
      %389 = vrot.lane.b32.xlu0 %v198, 1
      %v390 = vpop.permute.xlu0 %389
      %391 = vrot.lane.b32.xlu0 %v199, 1
      %v392 = vpop.permute.xlu0 %391
      %393 = vrot.lane.b32.xlu0 %v200, 1
      %v394 = vpop.permute.xlu0 %393
      %395 = vrot.lane.b32.xlu0 %v201, 1
      %v396 = vpop.permute.xlu0 %395
      %vm397 = vcmask 7168
      %v398 = vsel %vm397, %v382, %v384
      %v399 = vsel %vm397, %v386, %v388
      %v400 = vsel %vm397, %v390, %v392
      %v401 = vsel %vm397, %v394, %v396
      %v406 = vsel %vm397, 0.0, %v382
      %v407 = vsel %vm397, 0.0, %v386
      %v408 = vsel %vm397, 0.0, %v390
      %v409 = vsel %vm397, 0.0, %v394
      %v414 = vrot.slane %v406, 7
      %v415 = vrot.slane %v398, 7
      %v416 = vrot.slane %v407, 7
      %v417 = vrot.slane %v399, 7
      %v418 = vrot.slane %v408, 7
      %v419 = vrot.slane %v400, 7
      %v420 = vrot.slane %v409, 7
      %v421 = vrot.slane %v401, 7
      %430 = vst [vmem:[#allocation2 + $0x10] sm:$0xe] %v414
      %431 = vst [vmem:[#allocation2 + $0x18] sm:$0xe] %v415
      %432 = vst [vmem:[#allocation2 + $0x50] sm:$0xe] %v416
      %433 = vst [vmem:[#allocation2 + $0x58] sm:$0xe] %v417
      %434 = vst [vmem:[#allocation2 + $0x90] sm:$0xe] %v418
      %435 = vst [vmem:[#allocation2 + $0x98] sm:$0xe] %v419
      %436 = vst [vmem:[#allocation2 + $0xd0] sm:$0xe] %v420
      %437 = vst [vmem:[#allocation2 + $0xd8] sm:$0xe] %v421
      %v438 = vcombine.low %v153, %v153
      %v439 = vcombine.low %v154, %v154
      %v440 = vcombine.low %v155, %v155
      %v441 = vcombine.low %v156, %v156
      %446 = vst [vmem:[#allocation2 + $0x10] sm:$0x70] %v438
      %447 = vst [vmem:[#allocation2 + $0x18] sm:$0x70] %v153
      %448 = vst [vmem:[#allocation2 + $0x50] sm:$0x70] %v439
      %449 = vst [vmem:[#allocation2 + $0x58] sm:$0x70] %v154
      %450 = vst [vmem:[#allocation2 + $0x90] sm:$0x70] %v440
      %451 = vst [vmem:[#allocation2 + $0x98] sm:$0x70] %v155
      %452 = vst [vmem:[#allocation2 + $0xd0] sm:$0x70] %v441
      %453 = vst [vmem:[#allocation2 + $0xd8] sm:$0x70] %v156
      %454 = vrot.lane.b32.xlu0 %v180, 127
      %v455 = vpop.permute.xlu0 %454
      %456 = vrot.lane.b32.xlu0 %v181, 127
      %v457 = vpop.permute.xlu0 %456
      %458 = vrot.lane.b32.xlu0 %v182, 127
      %v459 = vpop.permute.xlu0 %458
      %460 = vrot.lane.b32.xlu0 %v183, 127
      %v461 = vpop.permute.xlu0 %460
      %462 = vrot.lane.b32.xlu0 %v184, 127
      %v463 = vpop.permute.xlu0 %462
      %464 = vrot.lane.b32.xlu0 %v185, 127
      %v465 = vpop.permute.xlu0 %464
      %466 = vrot.lane.b32.xlu0 %v186, 127
      %v467 = vpop.permute.xlu0 %466
      %468 = vrot.lane.b32.xlu0 %v187, 127
      %v469 = vpop.permute.xlu0 %468
      %vm470 = vcmask 1039360
      %v471 = vsel %vm470, %v455, %v457
      %v472 = vsel %vm470, %v459, %v461
      %v473 = vsel %vm470, %v463, %v465
      %v474 = vsel %vm470, %v467, %v469
      %v479 = vsel %vm470, %v457, 0.0
      %v480 = vsel %vm470, %v461, 0.0
      %v481 = vsel %vm470, %v465, 0.0
      %v482 = vsel %vm470, %v469, 0.0
      %v487 = vrot.slane %v471, 1
      %v488 = vrot.slane %v479, 1
      %v489 = vrot.slane %v472, 1
      %v490 = vrot.slane %v480, 1
      %v491 = vrot.slane %v473, 1
      %v492 = vrot.slane %v481, 1
      %v493 = vrot.slane %v474, 1
      %v494 = vrot.slane %v482, 1
      %503 = vst [vmem:[#allocation2 + $0x10] sm:$0x80] %v487
      %504 = vst [vmem:[#allocation2 + $0x18] sm:$0x80] %v488
      %505 = vst [vmem:[#allocation2 + $0x20] sm:$0x3] %v487
      %506 = vst [vmem:[#allocation2 + $0x28] sm:$0x3] %v488
      %507 = vst [vmem:[#allocation2 + $0x50] sm:$0x80] %v489
      %508 = vst [vmem:[#allocation2 + $0x58] sm:$0x80] %v490
      %509 = vst [vmem:[#allocation2 + $0x60] sm:$0x3] %v489
      %510 = vst [vmem:[#allocation2 + $0x68] sm:$0x3] %v490
      %511 = vst [vmem:[#allocation2 + $0x90] sm:$0x80] %v491
      %512 = vst [vmem:[#allocation2 + $0x98] sm:$0x80] %v492
      %513 = vst [vmem:[#allocation2 + $0xa0] sm:$0x3] %v491
      %514 = vst [vmem:[#allocation2 + $0xa8] sm:$0x3] %v492
      %515 = vst [vmem:[#allocation2 + $0xd0] sm:$0x80] %v493
      %516 = vst [vmem:[#allocation2 + $0xd8] sm:$0x80] %v494
      %517 = vst [vmem:[#allocation2 + $0xe0] sm:$0x3] %v493
      %518 = vst [vmem:[#allocation2 + $0xe8] sm:$0x3] %v494
      %519 = vrot.lane.b32.xlu0 %v194, 113
      %v520 = vpop.permute.xlu0 %519
      %521 = vrot.lane.b32.xlu0 %v195, 113
      %v522 = vpop.permute.xlu0 %521
      %523 = vrot.lane.b32.xlu0 %v196, 113
      %v524 = vpop.permute.xlu0 %523
      %525 = vrot.lane.b32.xlu0 %v197, 113
      %v526 = vpop.permute.xlu0 %525
      %527 = vrot.lane.b32.xlu0 %v198, 113
      %v528 = vpop.permute.xlu0 %527
      %529 = vrot.lane.b32.xlu0 %v199, 113
      %v530 = vpop.permute.xlu0 %529
      %531 = vrot.lane.b32.xlu0 %v200, 113
      %v532 = vpop.permute.xlu0 %531
      %533 = vrot.lane.b32.xlu0 %v201, 113
      %v534 = vpop.permute.xlu0 %533
      %vm535 = vcmask 924672
      %v536 = vsel %vm535, %v520, %v522
      %v537 = vsel %vm535, %v524, %v526
      %v538 = vsel %vm535, %v528, %v530
      %v539 = vsel %vm535, %v532, %v534
      %v544 = vsel %vm535, %v522, 0.0
      %v545 = vsel %vm535, %v526, 0.0
      %v546 = vsel %vm535, %v530, 0.0
      %v547 = vsel %vm535, %v534, 0.0
      %v552 = vrot.slane %v536, 6
      %v553 = vrot.slane %v544, 6
      %v554 = vrot.slane %v537, 6
      %v555 = vrot.slane %v545, 6
      %v556 = vrot.slane %v538, 6
      %v557 = vrot.slane %v546, 6
      %v558 = vrot.slane %v539, 6
      %v559 = vrot.slane %v547, 6
      %568 = vst [vmem:[#allocation2 + $0x20] sm:$0x1c] %v552
      %569 = vst [vmem:[#allocation2 + $0x28] sm:$0x1c] %v553
      %570 = vst [vmem:[#allocation2 + $0x60] sm:$0x1c] %v554
      %571 = vst [vmem:[#allocation2 + $0x68] sm:$0x1c] %v555
      %572 = vst [vmem:[#allocation2 + $0xa0] sm:$0x1c] %v556
      %573 = vst [vmem:[#allocation2 + $0xa8] sm:$0x1c] %v557
      %574 = vst [vmem:[#allocation2 + $0xe0] sm:$0x1c] %v558
      %575 = vst [vmem:[#allocation2 + $0xe8] sm:$0x1c] %v559
      %576 = vrot.lane.b32.xlu0 %v153, 112
      %v577 = vpop.permute.xlu0 %576
      %578 = vrot.lane.b32.xlu0 %v172, 112
      %v579 = vpop.permute.xlu0 %578
      %580 = vrot.lane.b32.xlu0 %v154, 112
      %v581 = vpop.permute.xlu0 %580
      %582 = vrot.lane.b32.xlu0 %v173, 112
      %v583 = vpop.permute.xlu0 %582
      %584 = vrot.lane.b32.xlu0 %v155, 112
      %v585 = vpop.permute.xlu0 %584
      %586 = vrot.lane.b32.xlu0 %v174, 112
      %v587 = vpop.permute.xlu0 %586
      %588 = vrot.lane.b32.xlu0 %v156, 112
      %v589 = vpop.permute.xlu0 %588
      %590 = vrot.lane.b32.xlu0 %v175, 112
      %v591 = vpop.permute.xlu0 %590
      %vm592 = vcmask 916480
      %v593 = vsel %vm592, %v577, %v579
      %v594 = vsel %vm592, %v581, %v583
      %v595 = vsel %vm592, %v585, %v587
      %v596 = vsel %vm592, %v589, %v591
      %v601 = vsel %vm592, %v579, 0.0
      %v602 = vsel %vm592, %v583, 0.0
      %v603 = vsel %vm592, %v587, 0.0
      %v604 = vsel %vm592, %v591, 0.0
      %v609 = vrot.slane %v593, 3
      %v610 = vrot.slane %v601, 3
      %v611 = vrot.slane %v594, 3
      %v612 = vrot.slane %v602, 3
      %v613 = vrot.slane %v595, 3
      %v614 = vrot.slane %v603, 3
      %v615 = vrot.slane %v596, 3
      %v616 = vrot.slane %v604, 3
      %625 = vst [vmem:[#allocation2 + $0x20] sm:$0xe0] %v609
      %626 = vst [vmem:[#allocation2 + $0x28] sm:$0xe0] %v610
      %627 = vst [vmem:[#allocation2 + $0x60] sm:$0xe0] %v611
      %628 = vst [vmem:[#allocation2 + $0x68] sm:$0xe0] %v612
      %629 = vst [vmem:[#allocation2 + $0xa0] sm:$0xe0] %v613
      %630 = vst [vmem:[#allocation2 + $0xa8] sm:$0xe0] %v614
      %631 = vst [vmem:[#allocation2 + $0xe0] sm:$0xe0] %v615
      %632 = vst [vmem:[#allocation2 + $0xe8] sm:$0xe0] %v616
      %633 = vrot.lane.b32.xlu0 %v180, 111
      %v634 = vpop.permute.xlu0 %633
      %635 = vrot.lane.b32.xlu0 %v181, 111
      %v636 = vpop.permute.xlu0 %635
      %637 = vrot.lane.b32.xlu0 %v182, 111
      %v638 = vpop.permute.xlu0 %637
      %639 = vrot.lane.b32.xlu0 %v183, 111
      %v640 = vpop.permute.xlu0 %639
      %641 = vrot.lane.b32.xlu0 %v184, 111
      %v642 = vpop.permute.xlu0 %641
      %643 = vrot.lane.b32.xlu0 %v185, 111
      %v644 = vpop.permute.xlu0 %643
      %645 = vrot.lane.b32.xlu0 %v186, 111
      %v646 = vpop.permute.xlu0 %645
      %647 = vrot.lane.b32.xlu0 %v187, 111
      %v648 = vpop.permute.xlu0 %647
      %vm649 = vcmask 908288
      %v650 = vsel %vm649, %v634, %v636
      %v651 = vsel %vm649, %v638, %v640
      %v652 = vsel %vm649, %v642, %v644
      %v653 = vsel %vm649, %v646, %v648
      %v662 = vsel %vm649, %v636, 0.0
      %v663 = vsel %vm649, %v640, 0.0
      %v664 = vsel %vm649, %v644, 0.0
      %v665 = vsel %vm649, %v648, 0.0
      %666 = vst [vmem:[#allocation2 + $0x30] sm:$0x7] %v650
      %667 = vst [vmem:[#allocation2 + $0x38] sm:$0x7] %v662
      %668 = vst [vmem:[#allocation2 + $0x70] sm:$0x7] %v651
      %669 = vst [vmem:[#allocation2 + $0x78] sm:$0x7] %v663
      %670 = vst [vmem:[#allocation2 + $0xb0] sm:$0x7] %v652
      %671 = vst [vmem:[#allocation2 + $0xb8] sm:$0x7] %v664
      %672 = vst [vmem:[#allocation2 + $0xf0] sm:$0x7] %v653
      %673 = vst [vmem:[#allocation2 + $0xf8] sm:$0x7] %v665
      %v674 = vld [vmem:[#allocation2] sm:$0xff]
      %v675 = vld [vmem:[#allocation2 + $0x8] sm:$0xff]
      %v676 = vld [vmem:[#allocation2 + $0x10] sm:$0xff]
      %v677 = vld [vmem:[#allocation2 + $0x18] sm:$0xff]
      %v678 = vld [vmem:[#allocation2 + $0x20] sm:$0xff]
      %v679 = vld [vmem:[#allocation2 + $0x28] sm:$0xff]
      %v680 = vld [vmem:[#allocation2 + $0x30] sm:$0x7]
      %v681 = vld [vmem:[#allocation2 + $0x38] sm:$0x7]
      %v682 = vld [vmem:[#allocation2 + $0x40] sm:$0xff]
      %v683 = vld [vmem:[#allocation2 + $0x48] sm:$0xff]
      %v684 = vld [vmem:[#allocation2 + $0x50] sm:$0xff]
      %v685 = vld [vmem:[#allocation2 + $0x58] sm:$0xff]
      %v686 = vld [vmem:[#allocation2 + $0x60] sm:$0xff]
      %v687 = vld [vmem:[#allocation2 + $0x68] sm:$0xff]
      %v688 = vld [vmem:[#allocation2 + $0x70] sm:$0x7]
      %v689 = vld [vmem:[#allocation2 + $0x78] sm:$0x7]
      %v690 = vld [vmem:[#allocation2 + $0x80] sm:$0xff]
      %v691 = vld [vmem:[#allocation2 + $0x88] sm:$0xff]
      %v692 = vld [vmem:[#allocation2 + $0x90] sm:$0xff]
      %v693 = vld [vmem:[#allocation2 + $0x98] sm:$0xff]
      %v694 = vld [vmem:[#allocation2 + $0xa0] sm:$0xff]
      %v695 = vld [vmem:[#allocation2 + $0xa8] sm:$0xff]
      %v696 = vld [vmem:[#allocation2 + $0xb0] sm:$0x7]
      %v697 = vld [vmem:[#allocation2 + $0xb8] sm:$0x7]
      %v698 = vld [vmem:[#allocation2 + $0xc0] sm:$0xff]
      %v699 = vld [vmem:[#allocation2 + $0xc8] sm:$0xff]
      %v700 = vld [vmem:[#allocation2 + $0xd0] sm:$0xff]
      %v701 = vld [vmem:[#allocation2 + $0xd8] sm:$0xff]
      %v702 = vld [vmem:[#allocation2 + $0xe0] sm:$0xff]
      %v703 = vld [vmem:[#allocation2 + $0xe8] sm:$0xff]
      %v704 = vld [vmem:[#allocation2 + $0xf0] sm:$0x7]
      %v705 = vld [vmem:[#allocation2 + $0xf8] sm:$0x7]
      %v706 = vpack.c.bf16 %v676, %v674
      %v707 = vpack.c.bf16 %v677, %v675
      %v708 = vpack.c.bf16 %v680, %v678
      %v709 = vpack.c.bf16 %v681, %v679
      %v710 = vpack.c.bf16 %v684, %v682
      %v711 = vpack.c.bf16 %v685, %v683
      %v712 = vpack.c.bf16 %v688, %v686
      %v713 = vpack.c.bf16 %v689, %v687
      %v714 = vpack.c.bf16 %v692, %v690
      %v715 = vpack.c.bf16 %v693, %v691
      %v716 = vpack.c.bf16 %v696, %v694
      %v717 = vpack.c.bf16 %v697, %v695
      %v718 = vpack.c.bf16 %v700, %v698
      %v719 = vpack.c.bf16 %v701, %v699
      %v720 = vpack.c.bf16 %v704, %v702
      %v721 = vpack.c.bf16 %v705, %v703
      %v722 = vld [vmem:[%s1] sm:$0xf]
      %v723 = vld [vmem:[%s1 + $0x4] sm:$0xf]
      %v726 = vunpack.c.l.b16 %v722
      %v727 = vunpack.c.l.b16 %v723
      %v728 = vpack.c.b16 %v727, %v726
      %vm729 = vcmask 220160
      %v731 = vsel %vm729, %v728, 0
      %vm733 = vcmask 1044480
      %vm734 = vcmask 1045504
      %v735 = vsel %vm733, 4294967295, 65535
      %v736 = vsel %vm734, %v735, 0
      %v738 = vand.u32 %v708, %v736
      %v741 = vand.u32 %v709, %v736
      %743 = vmatprep.subr.bf16.mxu0 %v707
      %744 = vmatpush1.bf16.msra.mxu0 %v706
      %745 = vmatprep.subr.bf16.mxu0 %v741
      %746 = vmatpush1.bf16.msra.mxu0 %v738
      %747 = vmatprep.subr.bf16.mxu0 0
      %748 = vmatpush1.bf16.msra.mxu0 0
      %749 = vmatprep.subr.bf16.mxu0 0
      %750 = vmatpush1.bf16.msra.mxu0 0
      %751 = vmatprep.subr.bf16.mxu0 0
      %752 = vmatpush1.bf16.msra.mxu0 0
      %753 = vmatprep.subr.bf16.mxu0 0
      %754 = vmatpush1.bf16.msra.mxu0 0
      %755 = vmatprep.subr.bf16.mxu0 0
      %756 = vmatpush1.bf16.msra.mxu0 0
      %757 = vmatprep.subr.bf16.mxu0 0
      %758 = vmatpush1.bf16.msra.mxu0 0
      %759 = vmatprep.subr.bf16.mxu0 0
      %760 = vmatpush1.bf16.msra.mxu0 0
      %761 = vmatprep.subr.bf16.mxu0 0
      %762 = vmatpush1.bf16.msra.mxu0 0
      %763 = vmatprep.subr.bf16.mxu0 0
      %764 = vmatpush1.bf16.msra.mxu0 0
      %765 = vmatprep.subr.bf16.mxu0 0
      %766 = vmatpush1.bf16.msra.mxu0 0
      %767 = vmatprep.subr.bf16.mxu0 0
      %768 = vmatpush1.bf16.msra.mxu0 0
      %769 = vmatprep.subr.bf16.mxu0 0
      %770 = vmatpush1.bf16.msra.mxu0 0
      %771 = vmatprep.subr.bf16.mxu0 0
      %772 = vmatpush1.bf16.msra.mxu0 0
      %773 = vmatprep.subr.bf16.mxu0 0
      %774 = vmatpush1.bf16.msra.mxu0 0
      %775 = vmatprep.mubr.bf16.mxu0 0
      %776 = vmatmul.mubr.bf16.gmra.mrb[0].mxu0 %v731
      %v777 = vpop.f32.mrb[0].mxu0
      %v778 = vadd.f32 0.0, %v777
      %v779 = vpop.f32.mrb[0].mxu0
      %v780 = vadd.f32 0.0, %v779
      %v781 = vpop.f32.mrb[0].mxu0
      %v782 = vadd.f32 0.0, %v781
      %v783 = vpop.f32.mrb[0].mxu0
      %v784 = vadd.f32 0.0, %v783
      %785 = vdwg.mxu0
      %v787 = vand.u32 %v712, %v736
      %v790 = vand.u32 %v713, %v736
      %792 = vmatprep.subr.bf16.mxu0 %v711
      %793 = vmatpush1.bf16.msra.mxu0 %v710
      %794 = vmatprep.subr.bf16.mxu0 %v790
      %795 = vmatpush1.bf16.msra.mxu0 %v787
      %796 = vmatprep.subr.bf16.mxu0 0
      %797 = vmatpush1.bf16.msra.mxu0 0
      %798 = vmatprep.subr.bf16.mxu0 0
      %799 = vmatpush1.bf16.msra.mxu0 0
      %800 = vmatprep.subr.bf16.mxu0 0
      %801 = vmatpush1.bf16.msra.mxu0 0
      %802 = vmatprep.subr.bf16.mxu0 0
      %803 = vmatpush1.bf16.msra.mxu0 0
      %804 = vmatprep.subr.bf16.mxu0 0
      %805 = vmatpush1.bf16.msra.mxu0 0
      %806 = vmatprep.subr.bf16.mxu0 0
      %807 = vmatpush1.bf16.msra.mxu0 0
      %808 = vmatprep.subr.bf16.mxu0 0
      %809 = vmatpush1.bf16.msra.mxu0 0
      %810 = vmatprep.subr.bf16.mxu0 0
      %811 = vmatpush1.bf16.msra.mxu0 0
      %812 = vmatprep.subr.bf16.mxu0 0
      %813 = vmatpush1.bf16.msra.mxu0 0
      %814 = vmatprep.subr.bf16.mxu0 0
      %815 = vmatpush1.bf16.msra.mxu0 0
      %816 = vmatprep.subr.bf16.mxu0 0
      %817 = vmatpush1.bf16.msra.mxu0 0
      %818 = vmatprep.subr.bf16.mxu0 0
      %819 = vmatpush1.bf16.msra.mxu0 0
      %820 = vmatprep.subr.bf16.mxu0 0
      %821 = vmatpush1.bf16.msra.mxu0 0
      %822 = vmatprep.subr.bf16.mxu0 0
      %823 = vmatpush1.bf16.msra.mxu0 0
      %824 = vmatprep.mubr.bf16.mxu0 0
      %825 = vmatmul.mubr.bf16.gmra.mrb[0].mxu0 %v731
      %v826 = vpop.f32.mrb[0].mxu0
      %v827 = vadd.f32 0.0, %v826
      %v828 = vpop.f32.mrb[0].mxu0
      %v829 = vadd.f32 0.0, %v828
      %v830 = vpop.f32.mrb[0].mxu0
      %v831 = vadd.f32 0.0, %v830
      %v832 = vpop.f32.mrb[0].mxu0
      %v833 = vadd.f32 0.0, %v832
      %834 = vdwg.mxu0
      %v836 = vand.u32 %v716, %v736
      %v839 = vand.u32 %v717, %v736
      %841 = vmatprep.subr.bf16.mxu0 %v715
      %842 = vmatpush1.bf16.msra.mxu0 %v714
      %843 = vmatprep.subr.bf16.mxu0 %v839
      %844 = vmatpush1.bf16.msra.mxu0 %v836
      %845 = vmatprep.subr.bf16.mxu0 0
      %846 = vmatpush1.bf16.msra.mxu0 0
      %847 = vmatprep.subr.bf16.mxu0 0
      %848 = vmatpush1.bf16.msra.mxu0 0
      %849 = vmatprep.subr.bf16.mxu0 0
      %850 = vmatpush1.bf16.msra.mxu0 0
      %851 = vmatprep.subr.bf16.mxu0 0
      %852 = vmatpush1.bf16.msra.mxu0 0
      %853 = vmatprep.subr.bf16.mxu0 0
      %854 = vmatpush1.bf16.msra.mxu0 0
      %855 = vmatprep.subr.bf16.mxu0 0
      %856 = vmatpush1.bf16.msra.mxu0 0
      %857 = vmatprep.subr.bf16.mxu0 0
      %858 = vmatpush1.bf16.msra.mxu0 0
      %859 = vmatprep.subr.bf16.mxu0 0
      %860 = vmatpush1.bf16.msra.mxu0 0
      %861 = vmatprep.subr.bf16.mxu0 0
      %862 = vmatpush1.bf16.msra.mxu0 0
      %863 = vmatprep.subr.bf16.mxu0 0
      %864 = vmatpush1.bf16.msra.mxu0 0
      %865 = vmatprep.subr.bf16.mxu0 0
      %866 = vmatpush1.bf16.msra.mxu0 0
      %867 = vmatprep.subr.bf16.mxu0 0
      %868 = vmatpush1.bf16.msra.mxu0 0
      %869 = vmatprep.subr.bf16.mxu0 0
      %870 = vmatpush1.bf16.msra.mxu0 0
      %871 = vmatprep.subr.bf16.mxu0 0
      %872 = vmatpush1.bf16.msra.mxu0 0
      %873 = vmatprep.mubr.bf16.mxu0 0
      %874 = vmatmul.mubr.bf16.gmra.mrb[0].mxu0 %v731
      %v875 = vpop.f32.mrb[0].mxu0
      %v876 = vadd.f32 0.0, %v875
      %v877 = vpop.f32.mrb[0].mxu0
      %v878 = vadd.f32 0.0, %v877
      %v879 = vpop.f32.mrb[0].mxu0
      %v880 = vadd.f32 0.0, %v879
      %v881 = vpop.f32.mrb[0].mxu0
      %v882 = vadd.f32 0.0, %v881
      %883 = vdwg.mxu0
      %v885 = vand.u32 %v720, %v736
      %v888 = vand.u32 %v721, %v736
      %890 = vmatprep.subr.bf16.mxu0 %v719
      %891 = vmatpush1.bf16.msra.mxu0 %v718
      %892 = vmatprep.subr.bf16.mxu0 %v888
      %893 = vmatpush1.bf16.msra.mxu0 %v885
      %894 = vmatprep.subr.bf16.mxu0 0
      %895 = vmatpush1.bf16.msra.mxu0 0
      %896 = vmatprep.subr.bf16.mxu0 0
      %897 = vmatpush1.bf16.msra.mxu0 0
      %898 = vmatprep.subr.bf16.mxu0 0
      %899 = vmatpush1.bf16.msra.mxu0 0
      %900 = vmatprep.subr.bf16.mxu0 0
      %901 = vmatpush1.bf16.msra.mxu0 0
      %902 = vmatprep.subr.bf16.mxu0 0
      %903 = vmatpush1.bf16.msra.mxu0 0
      %904 = vmatprep.subr.bf16.mxu0 0
      %905 = vmatpush1.bf16.msra.mxu0 0
      %906 = vmatprep.subr.bf16.mxu0 0
      %907 = vmatpush1.bf16.msra.mxu0 0
      %908 = vmatprep.subr.bf16.mxu0 0
      %909 = vmatpush1.bf16.msra.mxu0 0
      %910 = vmatprep.subr.bf16.mxu0 0
      %911 = vmatpush1.bf16.msra.mxu0 0
      %912 = vmatprep.subr.bf16.mxu0 0
      %913 = vmatpush1.bf16.msra.mxu0 0
      %914 = vmatprep.subr.bf16.mxu0 0
      %915 = vmatpush1.bf16.msra.mxu0 0
      %916 = vmatprep.subr.bf16.mxu0 0
      %917 = vmatpush1.bf16.msra.mxu0 0
      %918 = vmatprep.subr.bf16.mxu0 0
      %919 = vmatpush1.bf16.msra.mxu0 0
      %920 = vmatprep.subr.bf16.mxu0 0
      %921 = vmatpush1.bf16.msra.mxu0 0
      %922 = vmatprep.mubr.bf16.mxu0 0
      %923 = vmatmul.mubr.bf16.gmra.mrb[0].mxu0 %v731
      %v924 = vpop.f32.mrb[0].mxu0
      %v925 = vadd.f32 0.0, %v924
      %v926 = vpop.f32.mrb[0].mxu0
      %v927 = vadd.f32 0.0, %v926
      %v928 = vpop.f32.mrb[0].mxu0
      %v929 = vadd.f32 0.0, %v928
      %v930 = vpop.f32.mrb[0].mxu0
      %v931 = vadd.f32 0.0, %v930
      %932 = vdwg.mxu0
      %933 = vst [vmem:[%s150] sm:$0xff] %v778
      %934 = vst [vmem:[%s150 + $0x8] sm:$0xff] %v780
      %935 = vst [vmem:[%s150 + $0x10] sm:$0xff] %v782
      %936 = vst [vmem:[%s150 + $0x18] sm:$0xff] %v784
      %937 = vst [vmem:[%s150 + $0x20] sm:$0xff] %v827
      %938 = vst [vmem:[%s150 + $0x28] sm:$0xff] %v829
      %939 = vst [vmem:[%s150 + $0x30] sm:$0xff] %v831
      %940 = vst [vmem:[%s150 + $0x38] sm:$0xff] %v833
      %941 = vst [vmem:[%s150 + $0x40] sm:$0xff] %v876
      %942 = vst [vmem:[%s150 + $0x48] sm:$0xff] %v878
      %943 = vst [vmem:[%s150 + $0x50] sm:$0xff] %v880
      %944 = vst [vmem:[%s150 + $0x58] sm:$0xff] %v882
      %945 = vst [vmem:[%s150 + $0x60] sm:$0xff] %v925
      %946 = vst [vmem:[%s150 + $0x68] sm:$0xff] %v927
      %947 = vst [vmem:[%s150 + $0x70] sm:$0xff] %v929
      %948 = vst [vmem:[%s150 + $0x78] sm:$0xff] %v931
      %s949 = smul.u32 4, %s13
      %p950 = scmp.lt.s32.totalorder %s949, 7
      %s951 = scalar_select %p950, %s949, 7
      %s952 = smul.addr %s951, 4
      %s953 = smul.addr %s952, 8
      %s954 = scalar_lea.vmem %s2, %s953
      // Predicated region
      $region29: #{preproc_forward.1} parent=27 // pred_check
        %p955 = pneg %p78
      $region30: #{preproc_forward.1} parent=27 // pred_check_branch
        %957 = sbr.rel (%p955) target = $region32
      $region31: #{preproc_forward.1} parent=27 // pred_region
        %s958 = smul.u32 4, %s13
      $region32: #{preproc_forward.1} parent=27 // pred_fallthru
        _
    $region28: #{preproc_forward.1} parent=5 // pred_fallthru
      _
    %p959 = scmp.le.s32.totalorder 2, %s8
    // Predicated region
    $region33: #{preproc_forward.1} parent=5 // pred_check
      %p960 = pneg %p959
    $region34: #{preproc_forward.1} parent=5 // pred_check_branch
      %962 = sbr.rel (%p960) target = $region36
    $region35: #{preproc_forward.1} parent=5 // pred_region
      %s963 = ssub.s32 %s8, 2
      // Predicated region
      $region37: #{preproc_forward.1} parent=35 // pred_check
        %p964 = pneg %p84
      $region38: #{preproc_forward.1} parent=35 // pred_check_branch
        %966 = sbr.rel (%p964) target = $region40
      $region39: #{preproc_forward.1} parent=35 // pred_region
        %s967 = smul.u32 4, %s14
        %p968 = scmp.lt.s32.totalorder %s967, 7
        %s969 = scalar_select %p968, %s967, 7
        %s970 = smul.addr %s969, 4
        %s971 = smul.addr %s970, 8
        %s972 = scalar_lea.vmem %s2, %s971
      $region40: #{preproc_forward.1} parent=35 // pred_fallthru
        _
    $region36: #{preproc_forward.1} parent=5 // pred_fallthru
      _
  $region6: #{preproc_forward.1} parent=0 // loop_footer
    %s12 = sadd.s32 1, %s8
  $region7: #{preproc_forward.1} parent=0 // loop_footer_branch
    %7 = sbr.rel target = $region3
  $region8: #{preproc_forward.1} parent=0 // loop_exit
    _

</llo_original>
